<compile_context>
chip_gen: v5e
topology: v5e:2x2
jax: 0.10.0
libtpu: 0.0.40
codegen_flags: <defaults>
</compile_context>

<pallas_src>
import jax
import jax.numpy as jnp
from jax.experimental import pallas as pl
from jax.experimental.pallas import tpu as pltpu

_LANE = 128
_SUBLANE = 8

# Arrays at/below this size are handled as one full-array VMEM block
# (no grid, no pipeline prologue).  Kept small so larger inputs get the
# pipelined / multi-TC path.
_SINGLE_BLOCK_MAX_BYTES = 512 * 1024


def _max_tile_bytes_for_device() -> int:
    """Per-generation max tile size (bytes) for the tiled path."""
    try:
        kind = jax.devices()[0].device_kind.lower()
    except Exception:  # defensive: unknown backend / CPU interpret
        kind = ""
    # v5e: default scoped VMEM is only 16 MiB -> cap at 2 MiB tiles
    # (in + out, double-buffered = 8 MiB).  v6e/v7x: 4 MiB tiles (16 MiB).
    if "v5" in kind:
        return 2 * 1024 * 1024
    return 4 * 1024 * 1024


def _relu_kernel(x_ref, o_ref):
    # Elementwise max(x, 0) on the current VMEM tile (VPU).
    o_ref[...] = jnp.maximum(x_ref[...], 0)


def pallas_relu(x: jax.Array) -> jax.Array:
    """ReLU over an arbitrary-shaped array via a lane-dense Pallas TPU kernel."""
    orig_shape = x.shape
    dtype = x.dtype
    n = x.size
    itemsize = jnp.dtype(dtype).itemsize

    if n == 0:
        return x

    if n % _LANE == 0:
        # Fast path: contiguous metadata reshape to a lane-dense 2D slab.
        rows = n // _LANE
        x2d = x.reshape(rows, _LANE)
        pad = 0
    else:
        # Fallback for ragged sizes (not hit by this module's [1,256,14,14]).
        pad = (-n) % _LANE
        flat = jnp.pad(jnp.ravel(x), (0, pad))
        rows = (n + pad) // _LANE
        x2d = flat.reshape(rows, _LANE)

    total_bytes = rows * _LANE * itemsize

    if total_bytes <= _SINGLE_BLOCK_MAX_BYTES:
        # Whole array as a single VMEM block: no grid, no pipeline overhead.
        out2d = pl.pallas_call(
            _relu_kernel,
            out_shape=jax.ShapeDtypeStruct((rows, _LANE), dtype),
        )(x2d)
    else:
        # Tiled, pipelined path.
        max_tile_bytes = _max_tile_bytes_for_device()
        max_block_rows = max(_SUBLANE, max_tile_bytes // (_LANE * itemsize))
        max_block_rows -= max_block_rows % _SUBLANE

        # Keep grid >= 2 so v7x can split the "parallel" axis across both
        # TensorCores: at most ceil(rows/2) rows per tile (rounded up to a
        # sublane multiple), capped at the per-generation max tile size.
        half_rows = -(-rows // 2)
        half_rows = -(-half_rows // _SUBLANE) * _SUBLANE
        block_rows = max(_SUBLANE, min(max_block_rows, half_rows))

        tile_bytes = block_rows * _LANE * itemsize
        grid = (pl.cdiv(rows, block_rows),)

        out2d = pl.pallas_call(
            _relu_kernel,
            out_shape=jax.ShapeDtypeStruct((rows, _LANE), dtype),
            grid=grid,
            in_specs=[pl.BlockSpec((block_rows, _LANE), lambda i: (i, 0))],
            out_specs=pl.BlockSpec((block_rows, _LANE), lambda i: (i, 0)),
            compiler_params=pltpu.CompilerParams(
                dimension_semantics=("parallel",),
                # in + out, double-buffered, plus headroom.
                vmem_limit_bytes=4 * tile_bytes + (4 << 20),
            ),
        )(x2d)

    if pad:
        out2d = out2d.reshape(-1)[:n]
    return out2d.reshape(orig_shape)


if __name__ == "__main__":
    relu = jax.jit(pallas_relu)
    key = jax.random.PRNGKey(0)

    # 1) Module's actual forward input: x382 of shape [1, 256, 14, 14]
    #    (~200 KB fp32 -> single-block path).
    x = jax.random.normal(key, (1, 256, 14, 14), dtype=jnp.float32)
    y = relu(x)
    jax.block_until_ready(y)
    ref = jnp.maximum(x, 0.0)
    assert y.shape == x.shape and y.dtype == x.dtype
    assert jnp.allclose(y, ref), "mismatch vs reference ReLU (single-block path)"

    # 2) Larger input to exercise the tiled / pipelined path (grid >= 2).
    k2, k3 = jax.random.split(key)
    xl = jax.random.normal(k2, (1536, 1024), dtype=jnp.float32)  # 6 MiB
    yl = relu(xl)
    jax.block_until_ready(yl)
    assert jnp.allclose(yl, jnp.maximum(xl, 0.0)), "mismatch (tiled path)"

    # 3) Ragged size (not a multiple of 128) to exercise the pad fallback.
    xr = jax.random.normal(k3, (3, 5, 7), dtype=jnp.float32)
    yr = relu(xr)
    jax.block_until_ready(yr)
    assert jnp.allclose(yr, jnp.maximum(xr, 0.0)), "mismatch (ragged path)"

    print("KERNEL_OK")
</pallas_src>

<mosaic_0001>
module attributes {stable_mosaic.version = 11 : i64} {
  func.func @_relu_kernel(%arg0: memref<392x128xf32, #tpu.memory_space<vmem>>, %arg1: memref<392x128xf32, #tpu.memory_space<vmem>>) attributes {dimension_semantics = [], scalar_prefetch = 0 : i64, scratch_operands = 0 : i64, tpu.core_type = #tpu.core_type<tc>} {
    %c0 = arith.constant 0 : index
    %c0_0 = arith.constant 0 : index
    %0 = vector.load %arg0[%c0, %c0_0] : memref<392x128xf32, #tpu.memory_space<vmem>>, vector<392x128xf32>
    %cst = arith.constant 0.000000e+00 : f32
    %1 = vector.broadcast %cst : f32 to vector<392x128xf32>
    %2 = arith.maximumf %0, %1 : vector<392x128xf32>
    %c0_1 = arith.constant 0 : index
    %c0_2 = arith.constant 0 : index
    %3 = vector.load %arg1[%c0_1, %c0_2] : memref<392x128xf32, #tpu.memory_space<vmem>>, vector<392x128xf32>
    tpu.vector_store %arg1[%c0_1, %c0_2], %2 {strides = array<i32>} : memref<392x128xf32, #tpu.memory_space<vmem>>, vector<392x128xf32>,
    return
  }
}

</mosaic_0001>

<llo_original>
// kernel: pallas_relu.1
$region0: #{pallas_relu.1}
  #allocation0 [shape = 'u32[]', space=smem, size = 0x4, offset = 0x4, fixed_abs, tag = 'smem constant byte address 0x4 - core index']
  #allocation1 [shape = 'u32[72,128]{1,0:T(1,128)}', space=vmem, size = 0x9000, scoped, tag = 'internal scratch']
  %s0 = inlined_call_operand.vmem [shape: f32[392,128], index: 0, kind: input, shape index: {}]
  %s1 = inlined_call_operand.vmem [shape: f32[392,128], index: 1, kind: output, shape index: {}]
  %s2 = sld [smem:[#allocation0]]
  $region14: #{pallas_relu.1} parent=0
    _
  %s4 = ssub.s32 1, %s2
  %s5 = scalar_select 0, %s4, %s2
  // Predicated region
  $region2: #{pallas_relu.1} parent=0 // pred_check
    _
  $region3: #{pallas_relu.1} parent=0 // pred_check_branch
    %7 = sbr.rel (0) target = $region5
  $region4: #{pallas_relu.1} parent=0 // pred_region
    _
  $region5: #{pallas_relu.1} parent=0 // pred_fallthru
    _
  %v8 = vld [vmem:[%s0] sm:$0xff]
  %v9 = vld [vmem:[%s0 + $0x8] sm:$0xff]
  %v10 = vld [vmem:[%s0 + $0x10] sm:$0xff]
  %v11 = vld [vmem:[%s0 + $0x18] sm:$0xff]
  %v12 = vld [vmem:[%s0 + $0x20] sm:$0xff]
  %v13 = vld [vmem:[%s0 + $0x28] sm:$0xff]
  %v14 = vld [vmem:[%s0 + $0x30] sm:$0xff]
  %v15 = vld [vmem:[%s0 + $0x38] sm:$0xff]
  %v16 = vld [vmem:[%s0 + $0x40] sm:$0xff]
  %v17 = vld [vmem:[%s0 + $0x48] sm:$0xff]
  %v18 = vld [vmem:[%s0 + $0x50] sm:$0xff]
  %v19 = vld [vmem:[%s0 + $0x58] sm:$0xff]
  %v20 = vld [vmem:[%s0 + $0x60] sm:$0xff]
  %v21 = vld [vmem:[%s0 + $0x68] sm:$0xff]
  %v22 = vld [vmem:[%s0 + $0x70] sm:$0xff]
  %v23 = vld [vmem:[%s0 + $0x78] sm:$0xff]
  %v24 = vld [vmem:[%s0 + $0x80] sm:$0xff]
  %v25 = vld [vmem:[%s0 + $0x88] sm:$0xff]
  %v26 = vld [vmem:[%s0 + $0x90] sm:$0xff]
  %v27 = vld [vmem:[%s0 + $0x98] sm:$0xff]
  %v28 = vld [vmem:[%s0 + $0xa0] sm:$0xff]
  %v29 = vld [vmem:[%s0 + $0xa8] sm:$0xff]
  %v30 = vld [vmem:[%s0 + $0xb0] sm:$0xff]
  %v31 = vld [vmem:[%s0 + $0xb8] sm:$0xff]
  %v32 = vld [vmem:[%s0 + $0xc0] sm:$0xff]
  %v33 = vld [vmem:[%s0 + $0xc8] sm:$0xff]
  %v34 = vld [vmem:[%s0 + $0xd0] sm:$0xff]
  %v35 = vld [vmem:[%s0 + $0xd8] sm:$0xff]
  %v36 = vld [vmem:[%s0 + $0xe0] sm:$0xff]
  %v37 = vld [vmem:[%s0 + $0xe8] sm:$0xff]
  %v38 = vld [vmem:[%s0 + $0xf0] sm:$0xff]
  %v39 = vld [vmem:[%s0 + $0xf8] sm:$0xff]
  %v40 = vld [vmem:[%s0 + $0x100] sm:$0xff]
  %v41 = vld [vmem:[%s0 + $0x108] sm:$0xff]
  %v42 = vld [vmem:[%s0 + $0x110] sm:$0xff]
  %v43 = vld [vmem:[%s0 + $0x118] sm:$0xff]
  %v44 = vld [vmem:[%s0 + $0x120] sm:$0xff]
  %v45 = vld [vmem:[%s0 + $0x128] sm:$0xff]
  %v46 = vld [vmem:[%s0 + $0x130] sm:$0xff]
  %v47 = vld [vmem:[%s0 + $0x138] sm:$0xff]
  %v48 = vld [vmem:[%s0 + $0x140] sm:$0xff]
  %v49 = vld [vmem:[%s0 + $0x148] sm:$0xff]
  %v50 = vld [vmem:[%s0 + $0x150] sm:$0xff]
  %v51 = vld [vmem:[%s0 + $0x158] sm:$0xff]
  %v52 = vld [vmem:[%s0 + $0x160] sm:$0xff]
  %v53 = vld [vmem:[%s0 + $0x168] sm:$0xff]
  %v54 = vld [vmem:[%s0 + $0x170] sm:$0xff]
  %v55 = vld [vmem:[%s0 + $0x178] sm:$0xff]
  %v56 = vld [vmem:[%s0 + $0x180] sm:$0xff]
  %v57 = vmax.f32 %v8, 0.0
  %v58 = vmax.f32 %v9, 0.0
  %v59 = vmax.f32 %v10, 0.0
  %v60 = vmax.f32 %v11, 0.0
  %v61 = vmax.f32 %v12, 0.0
  %v62 = vmax.f32 %v13, 0.0
  %v63 = vmax.f32 %v14, 0.0
  %v64 = vmax.f32 %v15, 0.0
  %v65 = vmax.f32 %v16, 0.0
  %v66 = vmax.f32 %v17, 0.0
  %v67 = vmax.f32 %v18, 0.0
  %v68 = vmax.f32 %v19, 0.0
  %v69 = vmax.f32 %v20, 0.0
  %v70 = vmax.f32 %v21, 0.0
  %v71 = vmax.f32 %v22, 0.0
  %v72 = vmax.f32 %v23, 0.0
  %v73 = vmax.f32 %v24, 0.0
  %v74 = vmax.f32 %v25, 0.0
  %v75 = vmax.f32 %v26, 0.0
  %v76 = vmax.f32 %v27, 0.0
  %v77 = vmax.f32 %v28, 0.0
  %v78 = vmax.f32 %v29, 0.0
  %v79 = vmax.f32 %v30, 0.0
  %v80 = vmax.f32 %v31, 0.0
  %v81 = vmax.f32 %v32, 0.0
  %v82 = vmax.f32 %v33, 0.0
  %v83 = vmax.f32 %v34, 0.0
  %v84 = vmax.f32 %v35, 0.0
  %v85 = vmax.f32 %v36, 0.0
  %v86 = vmax.f32 %v37, 0.0
  %v87 = vmax.f32 %v38, 0.0
  %v88 = vmax.f32 %v39, 0.0
  %v89 = vmax.f32 %v40, 0.0
  %v90 = vmax.f32 %v41, 0.0
  %v91 = vmax.f32 %v42, 0.0
  %v92 = vmax.f32 %v43, 0.0
  %v93 = vmax.f32 %v44, 0.0
  %v94 = vmax.f32 %v45, 0.0
  %v95 = vmax.f32 %v46, 0.0
  %v96 = vmax.f32 %v47, 0.0
  %v97 = vmax.f32 %v48, 0.0
  %v98 = vmax.f32 %v49, 0.0
  %v99 = vmax.f32 %v50, 0.0
  %v100 = vmax.f32 %v51, 0.0
  %v101 = vmax.f32 %v52, 0.0
  %v102 = vmax.f32 %v53, 0.0
  %v103 = vmax.f32 %v54, 0.0
  %v104 = vmax.f32 %v55, 0.0
  %v105 = vmax.f32 %v56, 0.0
  %106 = vst [vmem:[%s1] sm:$0xff] %v57
  %107 = vst [vmem:[%s1 + $0x8] sm:$0xff] %v58
  %108 = vst [vmem:[%s1 + $0x10] sm:$0xff] %v59
  %109 = vst [vmem:[%s1 + $0x18] sm:$0xff] %v60
  %110 = vst [vmem:[%s1 + $0x20] sm:$0xff] %v61
  %111 = vst [vmem:[%s1 + $0x28] sm:$0xff] %v62
  %112 = vst [vmem:[%s1 + $0x30] sm:$0xff] %v63
  %113 = vst [vmem:[%s1 + $0x38] sm:$0xff] %v64
  %114 = vst [vmem:[%s1 + $0x40] sm:$0xff] %v65
  %115 = vst [vmem:[%s1 + $0x48] sm:$0xff] %v66
  %116 = vst [vmem:[%s1 + $0x50] sm:$0xff] %v67
  %117 = vst [vmem:[%s1 + $0x58] sm:$0xff] %v68
  %118 = vst [vmem:[%s1 + $0x60] sm:$0xff] %v69
  %119 = vst [vmem:[%s1 + $0x68] sm:$0xff] %v70
  %120 = vst [vmem:[%s1 + $0x70] sm:$0xff] %v71
  %121 = vst [vmem:[%s1 + $0x78] sm:$0xff] %v72
  %122 = vst [vmem:[%s1 + $0x80] sm:$0xff] %v73
  %123 = vst [vmem:[%s1 + $0x88] sm:$0xff] %v74
  %124 = vst [vmem:[%s1 + $0x90] sm:$0xff] %v75
  %125 = vst [vmem:[%s1 + $0x98] sm:$0xff] %v76
  %126 = vst [vmem:[%s1 + $0xa0] sm:$0xff] %v77
  %127 = vst [vmem:[%s1 + $0xa8] sm:$0xff] %v78
  %128 = vst [vmem:[%s1 + $0xb0] sm:$0xff] %v79
  %129 = vst [vmem:[%s1 + $0xb8] sm:$0xff] %v80
  %130 = vst [vmem:[%s1 + $0xc0] sm:$0xff] %v81
  %131 = vst [vmem:[%s1 + $0xc8] sm:$0xff] %v82
  %132 = vst [vmem:[%s1 + $0xd0] sm:$0xff] %v83
  %133 = vst [vmem:[%s1 + $0xd8] sm:$0xff] %v84
  %134 = vst [vmem:[%s1 + $0xe0] sm:$0xff] %v85
  %135 = vst [vmem:[%s1 + $0xe8] sm:$0xff] %v86
  %136 = vst [vmem:[%s1 + $0xf0] sm:$0xff] %v87
  %137 = vst [vmem:[%s1 + $0xf8] sm:$0xff] %v88
  %138 = vst [vmem:[%s1 + $0x100] sm:$0xff] %v89
  %139 = vst [vmem:[%s1 + $0x108] sm:$0xff] %v90
  %140 = vst [vmem:[%s1 + $0x110] sm:$0xff] %v91
  %141 = vst [vmem:[%s1 + $0x118] sm:$0xff] %v92
  %142 = vst [vmem:[%s1 + $0x120] sm:$0xff] %v93
  %143 = vst [vmem:[%s1 + $0x128] sm:$0xff] %v94
  %144 = vst [vmem:[%s1 + $0x130] sm:$0xff] %v95
  %145 = vst [vmem:[%s1 + $0x138] sm:$0xff] %v96
  %146 = vst [vmem:[%s1 + $0x140] sm:$0xff] %v97
  %147 = vst [vmem:[%s1 + $0x148] sm:$0xff] %v98
  %148 = vst [vmem:[%s1 + $0x150] sm:$0xff] %v99
  %149 = vst [vmem:[%s1 + $0x158] sm:$0xff] %v100
  %150 = vst [vmem:[%s1 + $0x160] sm:$0xff] %v101
  %151 = vst [vmem:[%s1 + $0x168] sm:$0xff] %v102
  %152 = vst [vmem:[%s1 + $0x170] sm:$0xff] %v103
  %153 = vst [vmem:[%s1 + $0x178] sm:$0xff] %v104
  %154 = vst [vmem:[%s1 + $0x180] sm:$0xff] %v105
  // Predicated region
  $region6: #{pallas_relu.1} parent=0 // pred_check
    _
  $region7: #{pallas_relu.1} parent=0 // pred_check_branch
    %156 = sbr.rel (0) target = $region9
  $region8: #{pallas_relu.1} parent=0 // pred_region
    _
  $region9: #{pallas_relu.1} parent=0 // pred_fallthru
    _
  // Predicated region
  $region10: #{pallas_relu.1} parent=0 // pred_check
    _
  $region11: #{pallas_relu.1} parent=0 // pred_check_branch
    %158 = sbr.rel (0) target = $region13
  $region12: #{pallas_relu.1} parent=0 // pred_region
    _
  $region13: #{pallas_relu.1} parent=0 // pred_fallthru
    _

</llo_original>
